<compile_context>
chip_gen: v7x
topology: tpu7x:2x2x1
jax: 0.10.0
libtpu: 0.0.40
codegen_flags: <defaults>
</compile_context>

<pallas_src>
import numpy as np
import jax
import jax.numpy as jnp
from jax.experimental import pallas as pl
from jax.experimental.pallas import tpu as pltpu


def _weighted_channel_sum_kernel(a_ref, x_ref, o_ref):
    # a_ref: (C,)        f32, SMEM   -- combined real-space filter taps
    # x_ref: (bt*C, T)   x-dtype, VMEM -- rows ordered [b0c0..b0c(C-1), b1c0, ...]
    # o_ref: (bt, T)     f32, VMEM   -- output slab (bt sublanes, T lanes)
    bt = o_ref.shape[0]
    C = x_ref.shape[0] // bt
    # Channel c of every batch row in the block: sublane-strided read, cast to
    # f32 (supports bf16/f16 inputs), FMA with a scalar tap from SMEM.
    acc = a_ref[0] * x_ref[pl.ds(0, bt, stride=C), :].astype(jnp.float32)
    for c in range(1, C):                     # C is static (=4): unrolled VPU FMAs
        acc = acc + a_ref[c] * x_ref[pl.ds(c, bt, stride=C), :].astype(jnp.float32)
    o_ref[...] = acc


_VMEM_BLOCK_BUDGET = 20 * 1024 * 1024   # double-buffered (x + out) blocks, bytes


def _round_up(v, m):
    return ((v + m - 1) // m) * m


def _choose_tiles(B, C, HW, x_itemsize, max_lane_tile):
    # Lane tile: multiple of 128 (unmasked lane-dense stores) or the full dim.
    if HW % 128 == 0:
        t = min(HW, max_lane_tile)
    else:
        t = HW                                           # full dim is always legal
    # Batch tile: as large as the VMEM budget allows (double-buffered x + out).
    per_batch_row = 2 * (C * t * x_itemsize + t * 4)
    bt_cap = max(1, _VMEM_BLOCK_BUDGET // per_batch_row)
    if B <= bt_cap:
        bt = B                                           # block dim == array dim (legal)
    elif bt_cap >= 8:
        bt = (bt_cap // 8) * 8                           # sublane-legal multiple of 8
    else:
        bt = min(8, B)                                   # tiny budget: smallest legal tile
    # Megacore (v7x): make sure a "parallel" axis has >= 2 steps when feasible.
    if pl.cdiv(B, bt) == 1 and pl.cdiv(HW, t) == 1:
        if HW % 128 == 0 and HW >= 256:
            t = ((HW // 2) // 128) * 128
        elif B >= 16:
            bt = max(8, ((B // 2) // 8) * 8)
    return bt, t


def global_filter_nope(x, complex_weight, *, max_lane_tile=16384):
    """x: (B, C, H, W) float (f32/bf16/...), complex_weight: (2, C).
    Returns (B, 1, H, W) float32."""
    B, C, H, W = x.shape
    HW = H * W
    itemsize = np.dtype(x.dtype).itemsize

    # ---- parameter algebra (tiny, wrapper-side) ----------------------------
    # a[c] = 1/sqrt(C) * sum_k ( wr[k]*cos(2*pi*k*c/C) + wi[k]*sin(2*pi*k*c/C) )
    kk = np.arange(C)[:, None]
    cc = np.arange(C)[None, :]
    scale = 1.0 / np.sqrt(C)                             # norm='ortho'
    cos_m = jnp.asarray(np.cos(2.0 * np.pi * kk * cc / C) * scale, jnp.float32)
    sin_m = jnp.asarray(np.sin(2.0 * np.pi * kk * cc / C) * scale, jnp.float32)
    wr = complex_weight[0].astype(jnp.float32)           # (C,) Re(weight)
    wi = complex_weight[1].astype(jnp.float32)           # (C,) Im(weight)
    a = (wr @ cos_m + wi @ sin_m).astype(jnp.float32)    # (C,) combined taps

    # ---- tiling -------------------------------------------------------------
    # Flatten to (B*C, HW) in the NATIVE dtype: free reshape, dense sublanes,
    # no extra read+write pass over x in XLA.
    x2 = x.reshape(B * C, HW)

    bt, t = _choose_tiles(B, C, HW, itemsize, max_lane_tile)
    grid = (pl.cdiv(B, bt), pl.cdiv(HW, t))

    # Explicit scoped-VMEM limit (account for lane/sublane padding of blocks).
    t_pad = _round_up(t, 128)
    x_block = _round_up(bt * C, 16) * t_pad * itemsize
    o_block = _round_up(bt, 8) * t_pad * 4
    vmem_limit = int(max(32 << 20, 2 * (x_block + o_block) + (4 << 20)))

    cost = pl.CostEstimate(
        flops=int(2 * C * B * HW),
        transcendentals=0,
        bytes_accessed=int(B * C * HW * itemsize + B * HW * 4 + 2 * C * 4))

    out2 = pl.pallas_call(
        _weighted_channel_sum_kernel,
        out_shape=jax.ShapeDtypeStruct((B, HW), jnp.float32),
        grid_spec=pltpu.PrefetchScalarGridSpec(
            num_scalar_prefetch=0,
            grid=grid,
            in_specs=[
                # combined taps live in SMEM (scalar reads, no per-step DMA stream)
                pl.BlockSpec(memory_space=pltpu.MemorySpace.SMEM),
                # x slab: (bt*C, t) dense rows of the flattened (B*C, HW) array
                pl.BlockSpec((bt * C, t), lambda bi, ti: (bi, ti)),
            ],
            # 2-D output (B, HW): sublane axis carries batch rows, lane axis dense
            out_specs=pl.BlockSpec((bt, t), lambda bi, ti: (bi, ti)),
        ),
        compiler_params=pltpu.CompilerParams(
            dimension_semantics=("parallel", "parallel"),
            vmem_limit_bytes=vmem_limit),
        cost_estimate=cost,
    )(a, x2)

    return out2.reshape(B, 1, H, W)


if __name__ == "__main__":
    def reference(xv, cw):
        xp = jnp.transpose(xv.astype(jnp.float32), (0, 2, 3, 1))
        Xf = jnp.fft.fft(xp, axis=3, norm="ortho")
        w = cw[0].astype(jnp.float32) + 1j * cw[1].astype(jnp.float32)
        return jnp.real(jnp.sum(Xf * w, axis=-1))[:, None, :, :].astype(jnp.float32)

    key = jax.random.PRNGKey(0)
    kx, kw, kx2 = jax.random.split(key, 3)

    # ---- test 1: module's deterministic init, small canonical shape --------
    B, C, H, W = 2, 4, 16, 16
    x = jax.random.normal(kx, (B, C, H, W), dtype=jnp.float32)
    complex_weight = jnp.array([[1.0, 0.0, 0.0, 0.0],
                                [0.0, 0.0, 0.0, 0.0]], dtype=jnp.float32)
    out = jax.block_until_ready(global_filter_nope(x, complex_weight))
    assert out.shape == (B, 1, H, W) and out.dtype == jnp.float32
    np.testing.assert_allclose(np.asarray(out),
                               np.asarray(reference(x, complex_weight)),
                               rtol=1e-5, atol=1e-5)

    # ---- test 2: non-trivial complex weight ---------------------------------
    cw2 = jax.random.normal(kw, (2, C), dtype=jnp.float32)
    out2 = jax.block_until_ready(global_filter_nope(x, cw2))
    np.testing.assert_allclose(np.asarray(out2),
                               np.asarray(reference(x, cw2)),
                               rtol=1e-5, atol=1e-5)

    # ---- test 3: odd batch + spatial size not a multiple of 128 (t = HW path)
    B3, H3, W3 = 3, 10, 13
    x3 = jax.random.normal(kx2, (B3, C, H3, W3), dtype=jnp.float32)
    out3 = jax.block_until_ready(global_filter_nope(x3, cw2))
    np.testing.assert_allclose(np.asarray(out3),
                               np.asarray(reference(x3, cw2)),
                               rtol=1e-5, atol=1e-5)

    print("KERNEL_OK")
</pallas_src>

<mosaic_0001>
module attributes {stable_mosaic.version = 11 : i64} {
  func.func @_weighted_channel_sum_kernel(%arg0: i32, %arg1: i32, %arg2: memref<4xf32, #tpu.memory_space<smem>>, %arg3: memref<8x128xf32, #tpu.memory_space<vmem>>, %arg4: memref<2x128xf32, #tpu.memory_space<vmem>>) attributes {dimension_semantics = [#tpu.dimension_semantics<parallel>, #tpu.dimension_semantics<parallel>], iteration_bounds = array<i64: 1, 2>, scalar_prefetch = 0 : i64, scratch_operands = 0 : i64, tpu.core_type = #tpu.core_type<tc>, window_params = [{transform_indices = @transform_0, window_bounds = array<i64: 4>}, {transform_indices = @transform_1, window_bounds = array<i64: 8, 128>}, {transform_indices = @transform_2, window_bounds = array<i64: 2, 128>}]} {
    %c0 = arith.constant 0 : index
    %0 = memref.load %arg2[%c0] : memref<4xf32, #tpu.memory_space<smem>>
    %c0_0 = arith.constant 0 : index
    %c0_1 = arith.constant 0 : index
    %1 = tpu.strided_load %arg3[%c0_0, %c0_1] {strides = array<i32: 4, 1>} : memref<8x128xf32, #tpu.memory_space<vmem>>, vector<2x128xf32>
    %2 = vector.broadcast %0 : f32 to vector<2x128xf32>
    %3 = arith.mulf %2, %1 : vector<2x128xf32>
    %c1 = arith.constant 1 : index
    %4 = memref.load %arg2[%c1] : memref<4xf32, #tpu.memory_space<smem>>
    %c1_2 = arith.constant 1 : index
    %c0_3 = arith.constant 0 : index
    %5 = tpu.strided_load %arg3[%c1_2, %c0_3] {strides = array<i32: 4, 1>} : memref<8x128xf32, #tpu.memory_space<vmem>>, vector<2x128xf32>
    %6 = vector.broadcast %4 : f32 to vector<2x128xf32>
    %7 = arith.mulf %6, %5 : vector<2x128xf32>
    %8 = arith.addf %3, %7 : vector<2x128xf32>
    %c2 = arith.constant 2 : index
    %9 = memref.load %arg2[%c2] : memref<4xf32, #tpu.memory_space<smem>>
    %c2_4 = arith.constant 2 : index
    %c0_5 = arith.constant 0 : index
    %10 = tpu.strided_load %arg3[%c2_4, %c0_5] {strides = array<i32: 4, 1>} : memref<8x128xf32, #tpu.memory_space<vmem>>, vector<2x128xf32>
    %11 = vector.broadcast %9 : f32 to vector<2x128xf32>
    %12 = arith.mulf %11, %10 : vector<2x128xf32>
    %13 = arith.addf %8, %12 : vector<2x128xf32>
    %c3 = arith.constant 3 : index
    %14 = memref.load %arg2[%c3] : memref<4xf32, #tpu.memory_space<smem>>
    %c3_6 = arith.constant 3 : index
    %c0_7 = arith.constant 0 : index
    %15 = tpu.strided_load %arg3[%c3_6, %c0_7] {strides = array<i32: 4, 1>} : memref<8x128xf32, #tpu.memory_space<vmem>>, vector<2x128xf32>
    %16 = vector.broadcast %14 : f32 to vector<2x128xf32>
    %17 = arith.mulf %16, %15 : vector<2x128xf32>
    %18 = arith.addf %13, %17 : vector<2x128xf32>
    %c0_8 = arith.constant 0 : index
    %c0_9 = arith.constant 0 : index
    %19 = vector.load %arg4[%c0_8, %c0_9] : memref<2x128xf32, #tpu.memory_space<vmem>>, vector<2x128xf32>
    tpu.vector_store %arg4[%c0_8, %c0_9], %18 {strides = array<i32>} : memref<2x128xf32, #tpu.memory_space<vmem>>, vector<2x128xf32>,
    return
  }
  func.func @transform_0(%arg0: i32, %arg1: i32) -> i32 {
    %c0_i32 = arith.constant 0 : i32
    %c0_i32_0 = arith.constant 0 : i32
    return %c0_i32 : i32
  }
  func.func @transform_1(%arg0: i32, %arg1: i32) -> (i32, i32) {
    %c0_i32 = arith.constant 0 : i32
    return %arg0, %arg1 : i32, i32
  }
  func.func @transform_2(%arg0: i32, %arg1: i32) -> (i32, i32) {
    %c0_i32 = arith.constant 0 : i32
    return %arg0, %arg1 : i32, i32
  }
}

</mosaic_0001>

<llo_original>
// kernel: tpu_custom_call.1
$region0: #{tpu_custom_call.1}
  #allocation0 [shape = 'u32[]', space=smem, size = 0x4, offset = 0x4, fixed_abs, tag = 'smem constant byte address 0x4 - core index']
  #allocation1 [shape = 'u32[144,128]{1,0:T(1,128)}', space=vmem, size = 0x12000, scoped, tag = 'internal scratch']
  %s0 = inlined_call_operand.hbm [shape: f32[4], index: 0, kind: input, shape index: {}]
  %s1 = inlined_call_operand.hbm [shape: f32[8,256], index: 1, kind: input, shape index: {}]
  %s2 = inlined_call_operand.hbm [shape: f32[2,256], index: 2, kind: output, shape index: {}]
  %s3 = sld [smem:[#allocation0]]
  $region49: #{tpu_custom_call.1} parent=0
    _
  %s5 = ssub.s32 1, %s3
  %s6 = scalar_select 0, %s5, %s3
  $region1: #{tpu_custom_call.1} parent=0
    #allocation2 [shape = 'u8[512]{0}', space=smem, size = 0x200, scoped, tag = 'input window, operand 0, single buffered']
    #allocation3 [shape = 's32[2]{0}', space=sflag, size = 0x8, scoped, tag = 'scoped memory for tpu_custom_call.1']
    #allocation4 [shape = 's32[2]{0}', space=sflag, size = 0x8, scoped, tag = 'scoped memory for tpu_custom_call.1']
    #allocation5 [shape = 's32[2]{0}', space=sflag, size = 0x8, scoped, tag = 'scoped memory for tpu_custom_call.1']
    #allocation6 [shape = 'u8[8192]{0}', space=vmem, size = 0x2000, scoped, tag = 'input window, operand 1']
    #allocation7 [shape = 'u8[2048]{0}', space=vmem, size = 0x800, scoped, tag = 'output window, operand 0']
    %7 = vsyncpa [#allocation5], 0
    %8 = vsyncpa [#allocation3], 0
    %s9 = scalar_lea.sflag [#allocation3], 1
    %10 = vsyncpa %s9, 0
    %11 = vsyncpa [#allocation4], 0
    %s12 = scalar_lea.sflag [#allocation4], 1
    %13 = vsyncpa %s12, 0
    loop: start=0, step=1, limit=4
    $region2: #{tpu_custom_call.1} parent=1 // loop_pre_header
      _
    $region3: #{tpu_custom_call.1} parent=1 // loop_header
      %s15 = sphi 0, %s19
      %p16 = scmp.ge.s32.totalorder %s15, 4
      %s22 = sphi 0, %s34
      %s23 = sphi 0, %s30
      %s24 = sphi 0, %s22
      %s25 = sphi 0, %s23
      %s26 = sphi 0, %s24
      %s27 = sphi 0, %s25
      %s35 = sphi 0, %s35
      %s37 = sphi 0, %s35
      %s38 = sphi 0, %s37
      %s52 = sphi 0, %s38
      %s60 = sphi 0, %s62
      %s63 = sphi 0, %s60
      %s64 = sphi 0, %s63
      %s80 = sphi 0, %s64
      %s88 = sphi 0, %s90
      %s91 = sphi 0, %s88
      %s92 = sphi 0, %s91
      %s108 = sphi 0, %s92
    $region4: #{tpu_custom_call.1} parent=1 // loop_header_branch
      %18 = sbr.rel (%p16) target = $region8
    $region5: #{tpu_custom_call.1} parent=1 // loop_body
      %s20 = ssub.s32 %s15, 1
      %s21 = ssub.s32 %s15, 2
      %s28 = sadd.s32 1, %s23
      %p29 = scmp.ge.s32.totalorder %s28, 2
      %s30 = scalar_select %p29, 0, %s28
      %s31 = sadd.s32 1, %s22
      %s32 = scalar_select %p29, %s31, %s22
      %p33 = scmp.ge.s32.totalorder %s32, 1
      %s34 = scalar_select %p33, 0, %s32
      %s36 = sadd.s32 %s35, 1
      %p39 = scmp.eq.s32.totalorder %s15, 1
      %p40 = scmp.ne.s32.totalorder %s35, %s37
      %p41 = scmp.eq.s32.totalorder %s15, 0
      %p42 = por %p40, %p41
      %p43 = scmp.ne.s32.totalorder %s35, %s37
      %p44 = scmp.eq.s32.totalorder %s20, 1
      %p45 = por %p43, %p44
      %p46 = scmp.ne.s32.totalorder %s37, %s38
      %p47 = scmp.eq.s32.totalorder %s20, 0
      %p48 = por %p46, %p47
      %p49 = scmp.ne.s32.totalorder %s37, %s38
      %p50 = scmp.eq.s32.totalorder %s21, 1
      %p51 = por %p49, %p50
      %p53 = scmp.ne.s32.totalorder %s38, %s52
      %p54 = scmp.eq.s32.totalorder %s21, 0
      %p55 = por %p53, %p54
      %s56 = ssub.s32 %s22, %s34
      %s57 = ssub.s32 %s23, %s30
      %s58 = sor.u32 %s56, %s57
      %p59 = scmp.eq.s32.totalorder %s58, 0
      %s61 = sadd.s32 %s60, 1
      %s62 = scalar_select %p59, %s60, %s61
      %p65 = pneg %p59
      %p66 = scmp.eq.s32.totalorder %s15, 1
      %p67 = por %p65, %p66
      %p68 = scmp.ne.s32.totalorder %s60, %s63
      %p69 = scmp.eq.s32.totalorder %s15, 0
      %p70 = por %p68, %p69
      %p71 = scmp.ne.s32.totalorder %s60, %s63
      %p72 = scmp.eq.s32.totalorder %s20, 1
      %p73 = por %p71, %p72
      %p74 = scmp.ne.s32.totalorder %s63, %s64
      %p75 = scmp.eq.s32.totalorder %s20, 0
      %p76 = por %p74, %p75
      %p77 = scmp.ne.s32.totalorder %s63, %s64
      %p78 = scmp.eq.s32.totalorder %s21, 1
      %p79 = por %p77, %p78
      %p81 = scmp.ne.s32.totalorder %s64, %s80
      %p82 = scmp.eq.s32.totalorder %s21, 0
      %p83 = por %p81, %p82
      %s84 = ssub.s32 %s22, %s34
      %s85 = ssub.s32 %s23, %s30
      %s86 = sor.u32 %s84, %s85
      %p87 = scmp.eq.s32.totalorder %s86, 0
      %s89 = sadd.s32 %s88, 1
      %s90 = scalar_select %p87, %s88, %s89
      %p93 = pneg %p87
      %p94 = scmp.eq.s32.totalorder %s15, 1
      %p95 = por %p93, %p94
      %p96 = scmp.ne.s32.totalorder %s88, %s91
      %p97 = scmp.eq.s32.totalorder %s15, 0
      %p98 = por %p96, %p97
      %p99 = scmp.ne.s32.totalorder %s88, %s91
      %p100 = scmp.eq.s32.totalorder %s20, 1
      %p101 = por %p99, %p100
      %p102 = scmp.ne.s32.totalorder %s91, %s92
      %p103 = scmp.eq.s32.totalorder %s20, 0
      %p104 = por %p102, %p103
      %p105 = scmp.ne.s32.totalorder %s91, %s92
      %p106 = scmp.eq.s32.totalorder %s21, 1
      %p107 = por %p105, %p106
      %p109 = scmp.ne.s32.totalorder %s92, %s108
      %p110 = scmp.eq.s32.totalorder %s21, 0
      %p111 = por %p109, %p110
      %p112 = scmp.le.s32.totalorder 1, %s15
      %p113 = scmp.lt.s32.totalorder %s15, 3
      %p114 = pnand %p112, %p113
      %p115 = pneg %p114
      // Predicated region
      $region9: #{tpu_custom_call.1} parent=5 // pred_check
        _
      $region10: #{tpu_custom_call.1} parent=5 // pred_check_branch
        %117 = sbr.rel (%p114) target = $region12
      $region11: #{tpu_custom_call.1} parent=5 // pred_region
        %s118 = ssub.s32 %s15, 1
        // Predicated region
        $region13: #{tpu_custom_call.1} parent=11 // pred_check
          %p119 = pneg %p48
        $region14: #{tpu_custom_call.1} parent=11 // pred_check_branch
          %121 = sbr.rel (%p119) target = $region16
        $region15: #{tpu_custom_call.1} parent=11 // pred_region
          %s123 = ssub.s32 16, 16
          %124 = vsyncadd [#allocation5], %s123
          %127 = dma.hbm_to_smem %s0, 16, [#allocation2], [#allocation5]
        $region16: #{tpu_custom_call.1} parent=11 // pred_fallthru
          _
      $region12: #{tpu_custom_call.1} parent=5 // pred_fallthru
        _
      %p128 = scmp.lt.s32.totalorder %s15, 2
      // Predicated region
      $region17: #{tpu_custom_call.1} parent=5 // pred_check
        %p129 = pneg %p128
      $region18: #{tpu_custom_call.1} parent=5 // pred_check_branch
        %131 = sbr.rel (%p129) target = $region20
      $region19: #{tpu_custom_call.1} parent=5 // pred_region
        // Predicated region
        $region21: #{tpu_custom_call.1} parent=19 // pred_check
          %p132 = pneg %p70
        $region22: #{tpu_custom_call.1} parent=19 // pred_check_branch
          %134 = sbr.rel (%p132) target = $region24
        $region23: #{tpu_custom_call.1} parent=19 // pred_region
          %s135 = sand.u32 %s60, 1
          %s136 = scalar_lea.sflag [#allocation3], %s135
          %s137 = sand.u32 %s60, 1
          %s138 = smul.addr %s137, 8
          %s139 = scalar_lea.vmem [#allocation6], %s138
          %s141 = ssub.s32 128, 128
          %142 = vsyncadd %s136, %s141
          %s143 = smul.addr %s22, 2
          %s144 = sadd.s32 %s23, %s143
          %s145 = smul.addr %s144, 128
          %s146 = scalar_lea.hbm %s1, %s145
          %s148 = sshll.u32 %s139, 4
          %s149 = int_to_ptr.vmem [resolvable:$true] %s148
          %151 = dma.hbm_to_vmem [thread:$0]  %s146, 128, %s149, %s136
        $region24: #{tpu_custom_call.1} parent=19 // pred_fallthru
          _
      $region20: #{tpu_custom_call.1} parent=5 // pred_fallthru
        _
      %p152 = scmp.le.s32.totalorder 1, %s15
      %p153 = scmp.lt.s32.totalorder %s15, 3
      %p154 = pnand %p152, %p153
      %p155 = pneg %p154
      // Predicated region
      $region25: #{tpu_custom_call.1} parent=5 // pred_check
        _
      $region26: #{tpu_custom_call.1} parent=5 // pred_check_branch
        %157 = sbr.rel (%p154) target = $region28
      $region27: #{tpu_custom_call.1} parent=5 // pred_region
        %s158 = ssub.s32 %s15, 1
        // Predicated region
        $region29: #{tpu_custom_call.1} parent=27 // pred_check
          %p159 = pneg %p48
        $region30: #{tpu_custom_call.1} parent=27 // pred_check_branch
          %161 = sbr.rel (%p159) target = $region32
        $region31: #{tpu_custom_call.1} parent=27 // pred_region
          %162 = dma.done [#allocation5], 16
        $region32: #{tpu_custom_call.1} parent=27 // pred_fallthru
          _
        %s163 = sand.u32 %s63, 1
        %s164 = scalar_lea.sflag [#allocation3], %s163
        %s165 = sand.u32 %s63, 1
        %s166 = smul.addr %s165, 8
        %s167 = scalar_lea.vmem [#allocation6], %s166
        // Predicated region
        $region33: #{tpu_custom_call.1} parent=27 // pred_check
          %p168 = pneg %p76
        $region34: #{tpu_custom_call.1} parent=27 // pred_check_branch
          %170 = sbr.rel (%p168) target = $region36
        $region35: #{tpu_custom_call.1} parent=27 // pred_region
          %171 = dma.done %s164, 128
        $region36: #{tpu_custom_call.1} parent=27 // pred_fallthru
          _
        %172 = sfence
        %p173 = pneg %p48
        %p174 = pneg %p45
        %s175 = sand.u32 %s63, 1
        %s176 = scalar_lea.sflag [#allocation3], %s175
        %s177 = sand.u32 %s63, 1
        %s178 = smul.addr %s177, 8
        %s179 = scalar_lea.vmem [#allocation6], %s178
        %p180 = pneg %p76
        %p181 = pneg %p73
        %p182 = pneg %p104
        %p183 = pneg %p101
        %s184 = sand.u32 %s91, 1
        %s185 = scalar_lea.sflag [#allocation4], %s184
        %s186 = sand.u32 %s91, 1
        %s187 = smul.addr %s186, 2
        %s188 = scalar_lea.vmem [#allocation7], %s187
        %s189 = sld [smem:[#allocation2]]
        %v190 = vld [vmem:[%s167] ss:$4 sm:$0x3]
        %v191 = vstv %s189
        %v192 = vmul.f32 %v191, %v190
        %s193 = sld [smem:[#allocation2 + $0x1]]
        %s194 = scalar_lea.vmem %s167, 1 [#allocation6]
        %v195 = vld [vmem:[%s194] ss:$4 sm:$0x3]
        %v196 = vstv %s193
        %v197 = vmul.f32 %v196, %v195
        %v198 = vadd.f32 %v192, %v197
        %s199 = sld [smem:[#allocation2 + $0x2]]
        %s200 = scalar_lea.vmem %s167, 2 [#allocation6]
        %v201 = vld [vmem:[%s200] ss:$4 sm:$0x3]
        %v202 = vstv %s199
        %v203 = vmul.f32 %v202, %v201
        %v204 = vadd.f32 %v198, %v203
        %s205 = sld [smem:[#allocation2 + $0x3]]
        %s206 = scalar_lea.vmem %s167, 3 [#allocation6]
        %v207 = vld [vmem:[%s206] ss:$4 sm:$0x3]
        %v208 = vstv %s205
        %v209 = vmul.f32 %v208, %v207
        %v210 = vadd.f32 %v204, %v209
        %211 = vst [vmem:[%s188] sm:$0x3] %v210
        %s212 = sand.u32 %s91, 1
        %s213 = scalar_lea.sflag [#allocation4], %s212
        %s214 = sand.u32 %s91, 1
        %s215 = smul.addr %s214, 2
        %s216 = scalar_lea.vmem [#allocation7], %s215
        // Predicated region
        $region37: #{tpu_custom_call.1} parent=27 // pred_check
          %p217 = pneg %p101
        $region38: #{tpu_custom_call.1} parent=27 // pred_check_branch
          %219 = sbr.rel (%p217) target = $region40
        $region39: #{tpu_custom_call.1} parent=27 // pred_region
          %s221 = ssub.s32 32, 32
          %222 = vsyncadd %s213, %s221
          %s223 = smul.addr %s24, 2
          %s224 = sadd.s32 %s25, %s223
          %s225 = smul.addr %s224, 32
          %s226 = scalar_lea.hbm %s2, %s225
          %s228 = sshll.u32 %s216, 4
          %s229 = int_to_ptr.vmem [resolvable:$true] %s228
          %231 = dma.vmem_to_hbm [thread:$0]  %s229, 32, %s226, %s213
        $region40: #{tpu_custom_call.1} parent=27 // pred_fallthru
          _
      $region28: #{tpu_custom_call.1} parent=5 // pred_fallthru
        _
      %p232 = scmp.le.s32.totalorder 2, %s15
      // Predicated region
      $region41: #{tpu_custom_call.1} parent=5 // pred_check
        %p233 = pneg %p232
      $region42: #{tpu_custom_call.1} parent=5 // pred_check_branch
        %235 = sbr.rel (%p233) target = $region44
      $region43: #{tpu_custom_call.1} parent=5 // pred_region
        %s236 = ssub.s32 %s15, 2
        // Predicated region
        $region45: #{tpu_custom_call.1} parent=43 // pred_check
          %p237 = pneg %p107
        $region46: #{tpu_custom_call.1} parent=43 // pred_check_branch
          %239 = sbr.rel (%p237) target = $region48
        $region47: #{tpu_custom_call.1} parent=43 // pred_region
          %s240 = sand.u32 %s92, 1
          %s241 = scalar_lea.sflag [#allocation4], %s240
          %s242 = sand.u32 %s92, 1
          %s243 = smul.addr %s242, 2
          %s244 = scalar_lea.vmem [#allocation7], %s243
          %245 = dma.done %s241, 32
        $region48: #{tpu_custom_call.1} parent=43 // pred_fallthru
          _
      $region44: #{tpu_custom_call.1} parent=5 // pred_fallthru
        _
    $region6: #{tpu_custom_call.1} parent=1 // loop_footer
      %s19 = sadd.s32 1, %s15
    $region7: #{tpu_custom_call.1} parent=1 // loop_footer_branch
      %14 = sbr.rel target = $region3
    $region8: #{tpu_custom_call.1} parent=1 // loop_exit
      _
    %246 = vsyncpa [#allocation3], 1
    %s247 = scalar_lea.sflag [#allocation3], 1
    %248 = vsyncpa %s247, 1
    %249 = vsyncpa [#allocation4], 1
    %s250 = scalar_lea.sflag [#allocation4], 1
    %251 = vsyncpa %s250, 1
    %252 = vsyncpa [#allocation5], 1
    %s253 = scalar_lea.sflag [#allocation5], 1
    %254 = vsyncpa %s253, 1

</llo_original>
